<compile_context>
chip_gen: v7x
topology: tpu7x:2x2x1
jax: 0.10.0
libtpu: 0.0.40
codegen_flags: <defaults>
</compile_context>

<pallas_src>
import functools

import jax
import jax.numpy as jnp
from jax.experimental import pallas as pl
from jax.experimental.pallas import tpu as pltpu


def _round_up(x: int, m: int) -> int:
    return ((x + m - 1) // m) * m


def _tpu_params():
    """Generation-aware knobs: (n_split, core_parallel, vmem_limit_bytes, tb_cap)."""
    kind = ""
    try:
        kind = jax.devices()[0].device_kind.lower()
    except Exception:
        pass
    vmem_cap = None
    try:
        vmem_cap = int(pltpu.get_tpu_info().vmem_capacity_bytes)
    except Exception:
        pass
    # v7x: 2 TensorCores per chip, 64 MiB physical VMEM per TC -> real 2-TC
    # split (CORE_PARALLEL) + tighter VMEM budget / tile cap.
    is_v7 = ("7" in kind) or (vmem_cap is not None and vmem_cap <= 64 * 1024 * 1024)
    if is_v7:
        return 2, True, 32 * 1024 * 1024, 1024
    # v5e / v6e: single TensorCore, 128 MiB physical VMEM -> no outer split,
    # larger scoped-VMEM limit and tile cap.
    return 1, False, 64 * 1024 * 1024, 2048


def _distill_kl_kernel(y_s_ref, y_t_ref, out_ref, acc_ref, *, inv_T: float,
                       scale: float):
    i = pl.program_id(1)

    @pl.when(i == 0)
    def _init():
        acc_ref[...] = jnp.zeros_like(acc_ref)

    s_raw = y_s_ref[...]
    t_raw = y_t_ref[...]

    # Row max in the native input dtype (exact; halves the XLU reduce traffic
    # for bf16 inputs), then a single exact f32 cast; shift/scale stay in f32.
    s_max = jnp.max(s_raw, axis=-1, keepdims=True).astype(jnp.float32)
    t_max = jnp.max(t_raw, axis=-1, keepdims=True).astype(jnp.float32)
    s_shift = (s_raw.astype(jnp.float32) - s_max) * inv_T
    t_shift = (t_raw.astype(jnp.float32) - t_max) * inv_T

    s_sum = jnp.sum(jnp.exp(s_shift), axis=-1, keepdims=True)
    t_exp = jnp.exp(t_shift)
    t_sum = jnp.sum(t_exp, axis=-1, keepdims=True)
    cross = jnp.sum(t_exp * (t_shift - s_shift), axis=-1, keepdims=True)

    # 1/t_sum: EUP approx reciprocal + one Newton-Raphson step -> near-exact
    # at the cost of two per-row VPU ops.
    r = pl.reciprocal(t_sum, approx=True)
    r = r * (2.0 - t_sum * r)

    # per-row KL: cross / t_sum - log(t_sum) + log(s_sum)
    row_kl = cross * r + jnp.log(s_sum) - jnp.log(t_sum)

    # Single (1,1) accumulator read-modify-write per step (replaces the old
    # (tb,1) masked-store chain).
    acc_ref[...] += jnp.sum(row_kl, keepdims=True)

    @pl.when(i == pl.num_programs(1) - 1)
    def _finalize():
        # One lane-dense (8,128) block per split; every element carries the
        # split total, the host wrapper reads element [0, 0].
        out_ref[...] = jnp.broadcast_to(acc_ref[...] * scale, out_ref.shape)


def distill_kl(y_s: jax.Array, y_t: jax.Array, T: float) -> jax.Array:
    assert y_s.shape == y_t.shape and y_s.ndim == 2
    B, C = y_s.shape
    dtype = y_s.dtype
    itemsize = jnp.dtype(dtype).itemsize

    n_split, core_parallel, vmem_limit, tb_cap = _tpu_params()

    # --- class (lane) axis: pad to a multiple of 128 with a large-negative
    #     *finite* fill (same constant for both inputs) so padded lanes drop
    #     out of exp()/sums without producing 0*inf NaNs.
    # TODO(synk): for very large class counts (C >~ 16-32k) the class axis
    #             should be tiled too (online logsumexp, innermost grid axis);
    #             here one tile spans the full padded class axis.
    Cp = _round_up(C, 128)
    if Cp != C:
        neg_fill = -min(1e30, float(jnp.finfo(dtype).max) * 0.25)
        y_s = jnp.pad(y_s, ((0, 0), (0, Cp - C)), constant_values=neg_fill)
        y_t = jnp.pad(y_t, ((0, 0), (0, Cp - C)), constant_values=neg_fill)

    # --- batch tile rows from the scoped-VMEM budget:
    #       2 inputs x 2 pipeline buffers x (tb, Cp) input tiles
    #     + ~6 f32 temporaries of tile shape inside the kernel body.
    per_row = Cp * (4 * itemsize + 6 * 4)
    tb = int(vmem_limit * 0.6) // per_row
    tb = max(8, min(tb_cap, (tb // 8) * 8))
    tb = min(tb, max(8, _round_up((B + n_split - 1) // n_split, 8)))
    # clamp so batch round-up padding (streamed zero rows = wasted HBM BW)
    # stays under ~5% of B
    while tb > 8:
        pad_rows = _round_up(B, n_split * tb) - B
        if pad_rows <= max(n_split * 8, B // 20):
            break
        tb = max(8, ((tb // 2) // 8) * 8)

    B2 = _round_up(max(B, 1), n_split * tb)
    if B2 != B:
        # zero-logit rows give identical uniform p_s / p_t -> exactly 0 KL
        y_s = jnp.pad(y_s, ((0, B2 - B), (0, 0)))
        y_t = jnp.pad(y_t, ((0, B2 - B), (0, 0)))

    tiles_per_split = B2 // (n_split * tb)
    in_idx = lambda c, i: (c * tiles_per_split + i, 0)

    kernel = functools.partial(_distill_kl_kernel,
                               inv_T=1.0 / float(T),
                               scale=float(T) * float(T) / B)  # un-padded B

    outer_sem = pltpu.CORE_PARALLEL if core_parallel else pltpu.ARBITRARY

    partials = pl.pallas_call(
        kernel,
        out_shape=jax.ShapeDtypeStruct((n_split * 8, 128), jnp.float32),
        grid=(n_split, tiles_per_split),
        in_specs=[
            pl.BlockSpec((tb, Cp), in_idx),
            pl.BlockSpec((tb, Cp), in_idx),
        ],
        out_specs=pl.BlockSpec((8, 128), lambda c, i: (c, 0)),
        scratch_shapes=[pltpu.VMEM((1, 1), jnp.float32)],
        compiler_params=pltpu.CompilerParams(
            dimension_semantics=(outer_sem, pltpu.ARBITRARY),
            vmem_limit_bytes=vmem_limit,
        ),
    )(y_s, y_t)

    # each split's total sits at element [0, 0] of its (8,128) block
    return jnp.sum(partials.reshape(n_split, 8, 128)[:, 0, 0])


def _reference(y_s, y_t, T):
    y_s = y_s.astype(jnp.float32)
    y_t = y_t.astype(jnp.float32)
    log_p_s = jax.nn.log_softmax(y_s / T, axis=1)
    log_p_t = jax.nn.log_softmax(y_t / T, axis=1)
    p_t = jnp.exp(log_p_t)
    kl = p_t * (log_p_t - log_p_s)
    return jnp.sum(kl) / y_s.shape[0] * T ** 2


if __name__ == "__main__":
    key = jax.random.PRNGKey(0)
    k1, k2 = jax.random.split(key)
    B, C = 8, 32          # small: batch of 8 examples, 32 classes
    T = 4.0               # distillation temperature

    y_s = jax.random.normal(k1, (B, C), dtype=jnp.float32)
    y_t = jax.random.normal(k2, (B, C), dtype=jnp.float32)

    # f32 inputs
    loss = distill_kl(y_s, y_t, T)
    jax.block_until_ready(loss)
    ref = _reference(y_s, y_t, T)
    assert jnp.allclose(loss, ref, rtol=1e-3, atol=1e-4), (loss, ref)

    # bf16 inputs (recommended at scale: halves HBM traffic)
    y_s16 = y_s.astype(jnp.bfloat16)
    y_t16 = y_t.astype(jnp.bfloat16)
    loss16 = distill_kl(y_s16, y_t16, T)
    jax.block_until_ready(loss16)
    ref16 = _reference(y_s16, y_t16, T)
    assert jnp.allclose(loss16, ref16, rtol=1e-2, atol=1e-3), (loss16, ref16)

    print("KERNEL_OK")
</pallas_src>

<mosaic_0001>
module attributes {stable_mosaic.version = 11 : i64} {
  func.func @_distill_kl_kernel(%arg0: i32, %arg1: i32, %arg2: memref<8x128xf32, #tpu.memory_space<vmem>>, %arg3: memref<8x128xf32, #tpu.memory_space<vmem>>, %arg4: memref<8x128xf32, #tpu.memory_space<vmem>>, %arg5: memref<1x1xf32, #tpu.memory_space<vmem>>) attributes {dimension_semantics = [#tpu.dimension_semantics<arbitrary>, #tpu.dimension_semantics<arbitrary>], iteration_bounds = array<i64: 1, 1>, scalar_prefetch = 0 : i64, scratch_operands = 1 : i64, tpu.core_type = #tpu.core_type<tc>, window_params = [{transform_indices = @transform_0, window_bounds = array<i64: 8, 128>}, {transform_indices = @transform_1, window_bounds = array<i64: 8, 128>}, {transform_indices = @transform_2, window_bounds = array<i64: 8, 128>}]} {
    %c0_i32 = arith.constant 0 : i32
    %0 = arith.cmpi eq, %arg1, %c0_i32 : i32
    %1 = arith.extui %0 : i1 to i32
    %c0_i32_0 = arith.constant 0 : i32
    %2 = arith.cmpi ne, %1, %c0_i32_0 : i32
    scf.if %2 {
      %cst_18 = arith.constant 0.000000e+00 : f32
      %48 = vector.broadcast %cst_18 : f32 to vector<1x1xf32>
      %c0_19 = arith.constant 0 : index
      %c0_20 = arith.constant 0 : index
      %49 = vector.load %arg5[%c0_19, %c0_20] : memref<1x1xf32, #tpu.memory_space<vmem>>, vector<1x1xf32>
      tpu.vector_store %arg5[%c0_19, %c0_20], %48 {strides = array<i32>} : memref<1x1xf32, #tpu.memory_space<vmem>>, vector<1x1xf32>,
    } else {
    }
    %c0 = arith.constant 0 : index
    %c0_1 = arith.constant 0 : index
    %3 = vector.load %arg2[%c0, %c0_1] : memref<8x128xf32, #tpu.memory_space<vmem>>, vector<8x128xf32>
    %c0_2 = arith.constant 0 : index
    %c0_3 = arith.constant 0 : index
    %4 = vector.load %arg3[%c0_2, %c0_3] : memref<8x128xf32, #tpu.memory_space<vmem>>, vector<8x128xf32>
    %cst = arith.constant dense<0xFF800000> : vector<8xf32>
    %5 = vector.multi_reduction <maximumf>, %3, %cst [1] : vector<8x128xf32> to vector<8xf32>
    %6 = vector.shape_cast %5 : vector<8xf32> to vector<8x1xf32>
    %cst_4 = arith.constant dense<0xFF800000> : vector<8xf32>
    %7 = vector.multi_reduction <maximumf>, %4, %cst_4 [1] : vector<8x128xf32> to vector<8xf32>
    %8 = vector.shape_cast %7 : vector<8xf32> to vector<8x1xf32>
    %9 = vector.broadcast %6 : vector<8x1xf32> to vector<8x128xf32>
    %10 = arith.subf %3, %9 : vector<8x128xf32>
    %cst_5 = arith.constant 2.500000e-01 : f32
    %11 = vector.broadcast %cst_5 : f32 to vector<8x128xf32>
    %12 = arith.mulf %10, %11 : vector<8x128xf32>
    %13 = vector.broadcast %8 : vector<8x1xf32> to vector<8x128xf32>
    %14 = arith.subf %4, %13 : vector<8x128xf32>
    %cst_6 = arith.constant 2.500000e-01 : f32
    %15 = vector.broadcast %cst_6 : f32 to vector<8x128xf32>
    %16 = arith.mulf %14, %15 : vector<8x128xf32>
    %17 = math.exp %12 : vector<8x128xf32>
    %cst_7 = arith.constant dense<0.000000e+00> : vector<8xf32>
    %18 = vector.multi_reduction <add>, %17, %cst_7 [1] : vector<8x128xf32> to vector<8xf32>
    %19 = vector.shape_cast %18 : vector<8xf32> to vector<8x1xf32>
    %20 = math.exp %16 : vector<8x128xf32>
    %cst_8 = arith.constant dense<0.000000e+00> : vector<8xf32>
    %21 = vector.multi_reduction <add>, %20, %cst_8 [1] : vector<8x128xf32> to vector<8xf32>
    %22 = vector.shape_cast %21 : vector<8xf32> to vector<8x1xf32>
    %23 = arith.subf %16, %12 : vector<8x128xf32>
    %24 = arith.mulf %20, %23 : vector<8x128xf32>
    %cst_9 = arith.constant dense<0.000000e+00> : vector<8xf32>
    %25 = vector.multi_reduction <add>, %24, %cst_9 [1] : vector<8x128xf32> to vector<8xf32>
    %26 = vector.shape_cast %25 : vector<8xf32> to vector<8x1xf32>
    %27 = tpu.reciprocal %22 {approx = true} : vector<8x1xf32> -> vector<8x1xf32>
    %28 = arith.mulf %22, %27 : vector<8x1xf32>
    %cst_10 = arith.constant 2.000000e+00 : f32
    %29 = vector.broadcast %cst_10 : f32 to vector<8x1xf32>
    %30 = arith.subf %29, %28 : vector<8x1xf32>
    %31 = arith.mulf %27, %30 : vector<8x1xf32>
    %32 = arith.mulf %26, %31 : vector<8x1xf32>
    %33 = math.log %19 : vector<8x1xf32>
    %34 = arith.addf %32, %33 : vector<8x1xf32>
    %35 = math.log %22 : vector<8x1xf32>
    %36 = arith.subf %34, %35 : vector<8x1xf32>
    %c0_11 = arith.constant 0 : index
    %c0_12 = arith.constant 0 : index
    %37 = vector.load %arg5[%c0_11, %c0_12] : memref<1x1xf32, #tpu.memory_space<vmem>>, vector<1x1xf32>
    %38 = vector.shape_cast %36 : vector<8x1xf32> to vector<1x8x1xf32>
    %cst_13 = arith.constant dense<0.000000e+00> : vector<1xf32>
    %39 = vector.multi_reduction <add>, %38, %cst_13 [1, 2] : vector<1x8x1xf32> to vector<1xf32>
    %40 = vector.shape_cast %39 : vector<1xf32> to vector<1x1x1xf32>
    %41 = vector.extract %40[0, 0, 0] : f32 from vector<1x1x1xf32>
    %42 = vector.broadcast %41 : f32 to vector<1x1xf32>
    %43 = arith.addf %37, %42 : vector<1x1xf32>
    %c0_14 = arith.constant 0 : index
    %c0_15 = arith.constant 0 : index
    %44 = vector.load %arg5[%c0_14, %c0_15] : memref<1x1xf32, #tpu.memory_space<vmem>>, vector<1x1xf32>
    tpu.vector_store %arg5[%c0_14, %c0_15], %43 {strides = array<i32>} : memref<1x1xf32, #tpu.memory_space<vmem>>, vector<1x1xf32>,
    %c0_i32_16 = arith.constant 0 : i32
    %45 = arith.cmpi eq, %arg1, %c0_i32_16 : i32
    %46 = arith.extui %45 : i1 to i32
    %c0_i32_17 = arith.constant 0 : i32
    %47 = arith.cmpi ne, %46, %c0_i32_17 : i32
    scf.if %47 {
      %c0_18 = arith.constant 0 : index
      %c0_19 = arith.constant 0 : index
      %48 = vector.load %arg5[%c0_18, %c0_19] : memref<1x1xf32, #tpu.memory_space<vmem>>, vector<1x1xf32>
      %cst_20 = arith.constant 2.000000e+00 : f32
      %49 = vector.broadcast %cst_20 : f32 to vector<1x1xf32>
      %50 = arith.mulf %48, %49 : vector<1x1xf32>
      %51 = vector.shape_cast %50 : vector<1x1xf32> to vector<1x1xf32>
      %52 = vector.broadcast %51 : vector<1x1xf32> to vector<8x128xf32>
      %c0_21 = arith.constant 0 : index
      %c0_22 = arith.constant 0 : index
      %53 = vector.load %arg4[%c0_21, %c0_22] : memref<8x128xf32, #tpu.memory_space<vmem>>, vector<8x128xf32>
      tpu.vector_store %arg4[%c0_21, %c0_22], %52 {strides = array<i32>} : memref<8x128xf32, #tpu.memory_space<vmem>>, vector<8x128xf32>,
    } else {
    }
    return
  }
  func.func @transform_0(%arg0: i32, %arg1: i32) -> (i32, i32) {
    %c1_i32 = arith.constant 1 : i32
    %0 = arith.muli %arg0, %c1_i32 : i32
    %1 = arith.addi %0, %arg1 : i32
    %c0_i32 = arith.constant 0 : i32
    %c0_i32_0 = arith.constant 0 : i32
    return %1, %c0_i32 : i32, i32
  }
  func.func @transform_1(%arg0: i32, %arg1: i32) -> (i32, i32) {
    %c1_i32 = arith.constant 1 : i32
    %0 = arith.muli %arg0, %c1_i32 : i32
    %1 = arith.addi %0, %arg1 : i32
    %c0_i32 = arith.constant 0 : i32
    %c0_i32_0 = arith.constant 0 : i32
    return %1, %c0_i32 : i32, i32
  }
  func.func @transform_2(%arg0: i32, %arg1: i32) -> (i32, i32) {
    %c0_i32 = arith.constant 0 : i32
    %c0_i32_0 = arith.constant 0 : i32
    return %arg0, %c0_i32 : i32, i32
  }
}

</mosaic_0001>

<llo_original>
// kernel: tpu_custom_call.1
$region0: #{tpu_custom_call.1}
  #allocation0 [shape = 'u32[]', space=smem, size = 0x4, offset = 0x4, fixed_abs, tag = 'smem constant byte address 0x4 - core index']
  #allocation1 [shape = 'u32[144,128]{1,0:T(1,128)}', space=vmem, size = 0x12000, scoped, tag = 'internal scratch']
  #allocation2 [shape = 'f32[1,1]{1,0:T(1,128)}', space=vmem, size = 0x200, scoped, tag = 'scratch operand']
  %s0 = inlined_call_operand.hbm [shape: f32[8,128], index: 0, kind: input, shape index: {}]
  %s1 = inlined_call_operand.hbm [shape: f32[8,128], index: 1, kind: input, shape index: {}]
  %s2 = inlined_call_operand.hbm [shape: f32[8,128], index: 2, kind: output, shape index: {}]
  %s3 = sld [smem:[#allocation0]]
  $region34: #{tpu_custom_call.1} parent=0
    _
  %s5 = ssub.s32 1, %s3
  %s6 = scalar_select 0, %s5, %s3
  $region1: #{tpu_custom_call.1} parent=0
    #allocation3 [shape = 'u8[4096]{0}', space=vmem, size = 0x1000, scoped, tag = 'input window, operand 0, single buffered']
    #allocation4 [shape = 's32[1]{0}', space=sflag, size = 0x4, scoped, tag = 'scoped memory for tpu_custom_call.1']
    #allocation5 [shape = 's32[1]{0}', space=sflag, size = 0x4, scoped, tag = 'scoped memory for tpu_custom_call.1']
    #allocation6 [shape = 'u8[4096]{0}', space=vmem, size = 0x1000, scoped, tag = 'input window, operand 1, single buffered']
    #allocation7 [shape = 's32[1]{0}', space=sflag, size = 0x4, scoped, tag = 'scoped memory for tpu_custom_call.1']
    #allocation8 [shape = 'u8[4096]{0}', space=vmem, size = 0x1000, scoped, tag = 'output window, operand 0, single buffered']
    %7 = vsyncpa [#allocation4], 0
    %8 = vsyncpa [#allocation7], 0
    %9 = vsyncpa [#allocation5], 0
    // Predicated region
    $region2: #{tpu_custom_call.1} parent=1 // pred_check
      _
    $region3: #{tpu_custom_call.1} parent=1 // pred_check_branch
      %11 = sbr.rel (0) target = $region5
    $region4: #{tpu_custom_call.1} parent=1 // pred_region
      %s12 = sadd.s32 0, 0
      %s14 = ssub.s32 128, 128
      %15 = vsyncadd [#allocation4], %s14
      %s16 = smul.addr %s12, 128
      %s17 = scalar_lea.hbm %s0, %s16
      %s19 = sshll.u32 [#allocation3], 4
      %s20 = int_to_ptr.vmem [resolvable:$true] %s19
      %22 = dma.hbm_to_vmem [thread:$0]  %s17, 128, %s20, [#allocation4]
    $region5: #{tpu_custom_call.1} parent=1 // pred_fallthru
      _
    // Predicated region
    $region6: #{tpu_custom_call.1} parent=1 // pred_check
      _
    $region7: #{tpu_custom_call.1} parent=1 // pred_check_branch
      %24 = sbr.rel (0) target = $region9
    $region8: #{tpu_custom_call.1} parent=1 // pred_region
      %s25 = sadd.s32 0, 0
      %s27 = ssub.s32 128, 128
      %28 = vsyncadd [#allocation7], %s27
      %s29 = smul.addr %s25, 128
      %s30 = scalar_lea.hbm %s1, %s29
      %s32 = sshll.u32 [#allocation6], 4
      %s33 = int_to_ptr.vmem [resolvable:$true] %s32
      %35 = dma.hbm_to_vmem [thread:$0]  %s30, 128, %s33, [#allocation7]
    $region9: #{tpu_custom_call.1} parent=1 // pred_fallthru
      _
    // Predicated region
    $region10: #{tpu_custom_call.1} parent=1 // pred_check
      _
    $region11: #{tpu_custom_call.1} parent=1 // pred_check_branch
      %37 = sbr.rel (0) target = $region13
    $region12: #{tpu_custom_call.1} parent=1 // pred_region
      %38 = dma.done [#allocation4], 128
    $region13: #{tpu_custom_call.1} parent=1 // pred_fallthru
      _
    // Predicated region
    $region14: #{tpu_custom_call.1} parent=1 // pred_check
      _
    $region15: #{tpu_custom_call.1} parent=1 // pred_check_branch
      %40 = sbr.rel (0) target = $region17
    $region16: #{tpu_custom_call.1} parent=1 // pred_region
      %41 = dma.done [#allocation7], 128
    $region17: #{tpu_custom_call.1} parent=1 // pred_fallthru
      _
    %s42 = sadd.s32 0, 0
    %s43 = sadd.s32 0, 0
    %p44 = scmp.eq.s32.totalorder 0, 0
    // Predicated region
    $region18: #{tpu_custom_call.1} parent=1 // pred_check
      %p45 = pneg %p44
    $region19: #{tpu_custom_call.1} parent=1 // pred_check_branch
      %47 = sbr.rel (%p45) target = $region21
    $region20: #{tpu_custom_call.1} parent=1 // pred_region
      %vm48 = vcmask 0
      %49 = vst.msk [vmem:[#allocation2] sm:$0x1] %vm48, 0.0
    $region21: #{tpu_custom_call.1} parent=1 // pred_fallthru
      _
    %v50 = vld [vmem:[#allocation3] sm:$0xff]
    %v51 = vld [vmem:[#allocation6] sm:$0xff]
    %52 = vmax.xlane.f32.xlu0 %v50
    %v53 = vpop.xlane.xlu0 %52
    %54 = vmax.xlane.f32.xlu0 %v51
    %v55 = vpop.xlane.xlu0 %54
    %v56 = vsub.f32 %v50, %v53
    %v57 = vmul.f32 %v56, 0.25
    %v58 = vsub.f32 %v51, %v55
    %v59 = vmul.f32 %v58, 0.25
    %v60 = vmul.f32 %v57, 1.442695
    %v61 = vpow.pop %v60
    %62 = vadd.xlane.f32.xlu0 %v61
    %v63 = vpop.xlane.xlu0 %62
    %v64 = vmul.f32 %v59, 1.442695
    %v65 = vpow.pop %v64
    %66 = vadd.xlane.f32.xlu0 %v65
    %v67 = vpop.xlane.xlu0 %66
    %v68 = vsub.f32 %v59, %v57
    %v69 = vmul.f32 %v65, %v68
    %70 = vadd.xlane.f32.xlu0 %v69
    %v71 = vpop.xlane.xlu0 %70
    %v72 = vrcp.pop %v67
    %v73 = vmul.f32 %v67, %v72
    %v74 = vsub.f32 2.0, %v73
    %v75 = vmul.f32 %v72, %v74
    %v76 = vmul.f32 %v71, %v75
    %v77 = vlog2.pop %v63
    %v78 = vmul.f32 %v77, 0.6931472
    %v79 = vadd.f32 %v76, %v78
    %v80 = vlog2.pop %v67
    %v81 = vmul.f32 %v80, 0.6931472
    %v82 = vsub.f32 %v79, %v81
    %v83 = vld [vmem:[#allocation2] sm:$0x1]
    %vm84 = vcmask 7168
    %v85 = vsel %vm84, %v82, 0.0
    %86 = vadd.xlane.f32.xlu0 %v85
    %v87 = vpop.xlane.xlu0 %86
    %v88 = vrot.slane %v87, 4
    %v89 = vadd.f32 %v87, %v88
    %v90 = vrot.slane %v89, 2
    %v91 = vadd.f32 %v89, %v90
    %v92 = vrot.slane %v91, 1
    %v93 = vadd.f32 %v91, %v92
    %s94 = vtos %v93
    %v95 = vstv %s94
    %v96 = vadd.f32 %v83, %v95
    %vm97 = vcmask 0
    %98 = vst.msk [vmem:[#allocation2] sm:$0x1] %vm97, %v96
    // Predicated region
    $region22: #{tpu_custom_call.1} parent=1 // pred_check
      %p99 = pneg %p44
    $region23: #{tpu_custom_call.1} parent=1 // pred_check_branch
      %101 = sbr.rel (%p99) target = $region25
    $region24: #{tpu_custom_call.1} parent=1 // pred_region
      %v102 = vld [vmem:[#allocation2] sm:$0x1]
      %v103 = vmul.f32 %v102, 2.0
      %v105 = vlaneseq
      %v106 = vshrl.u32 %v105, 7
      %v107 = vsub.s32 0, %v106
      %v108 = vrot.slane %v103, %v107
      %109 = vset.pattern.permute.xlu0 0
      %110 = vperm.xlu0 %109, %v108
      %v111 = vpop.permute.xlu0 %110
      %113 = vst [vmem:[#allocation8] sm:$0xff] %v111
    $region25: #{tpu_custom_call.1} parent=1 // pred_fallthru
      _
    // Predicated region
    $region26: #{tpu_custom_call.1} parent=1 // pred_check
      _
    $region27: #{tpu_custom_call.1} parent=1 // pred_check_branch
      %115 = sbr.rel (0) target = $region29
    $region28: #{tpu_custom_call.1} parent=1 // pred_region
      %s117 = ssub.s32 128, 128
      %118 = vsyncadd [#allocation5], %s117
      %s120 = sshll.u32 [#allocation8], 4
      %s121 = int_to_ptr.vmem [resolvable:$true] %s120
      %123 = dma.vmem_to_hbm [thread:$0]  %s121, 128, %s2, [#allocation5]
    $region29: #{tpu_custom_call.1} parent=1 // pred_fallthru
      _
    // Predicated region
    $region30: #{tpu_custom_call.1} parent=1 // pred_check
      _
    $region31: #{tpu_custom_call.1} parent=1 // pred_check_branch
      %125 = sbr.rel (0) target = $region33
    $region32: #{tpu_custom_call.1} parent=1 // pred_region
      %126 = dma.done [#allocation5], 128
    $region33: #{tpu_custom_call.1} parent=1 // pred_fallthru
      _
    %127 = vsyncpa [#allocation4], 1
    %128 = vsyncpa [#allocation7], 1
    %129 = vsyncpa [#allocation5], 1

</llo_original>
